<compile_context>
chip_gen: v7x
topology: tpu7x:2x2x1
jax: 0.10.0
libtpu: 0.0.40
codegen_flags: <defaults>
</compile_context>

<pallas_src>
import functools

import jax
import jax.numpy as jnp
from jax.experimental import pallas as pl
from jax.experimental.pallas import tpu as pltpu


def _round_up(x, m):
    return (x + m - 1) // m * m


# ---------------------------------------------------------------------------
# Pallas kernels
# ---------------------------------------------------------------------------

def _conv_stats_kernel(g_ref, w_ref, y_ref, stats_ref):
    """One im2col matmul per N-tile + per-tile BatchNorm partial stats."""
    y = jnp.dot(g_ref[...], w_ref[...], preferred_element_type=jnp.float32)
    y_ref[...] = y
    s0 = jnp.sum(y, axis=0, keepdims=True)        # (1, C_pad)  per-channel sum
    s1 = jnp.sum(y * y, axis=0, keepdims=True)    # (1, C_pad)  per-channel sumsq
    stats_ref[...] = jnp.concatenate([s0, s1], axis=0)[None]


def subm_conv(g, w_flat, *, tile_n):
    """g: (N, 27*Cin) im2col matrix; w_flat: (27*Cin, Cout).

    Returns (y, stats): y is (N_pad, C_pad) f32 conv output (row/channel
    zero-padded, lane-dense); stats is (num_tiles, 2, C_pad) per-tile
    [sum, sumsq] partials."""
    N, K = g.shape
    Cout = w_flat.shape[1]
    K_pad = _round_up(K, 128)
    C_pad = _round_up(Cout, 128)
    N_pad = _round_up(N, tile_n)
    num_tiles = N_pad // tile_n

    # bf16 MXU operands (f32 accumulation in-kernel); zero padding so pad
    # rows/cols contribute nothing.
    g_p = jnp.pad(g.astype(jnp.bfloat16), ((0, N_pad - N), (0, K_pad - K)))
    w_p = jnp.pad(w_flat.astype(jnp.bfloat16), ((0, K_pad - K), (0, C_pad - Cout)))

    return pl.pallas_call(
        _conv_stats_kernel,
        out_shape=(
            jax.ShapeDtypeStruct((N_pad, C_pad), jnp.float32),
            jax.ShapeDtypeStruct((num_tiles, 2, C_pad), jnp.float32),
        ),
        grid_spec=pltpu.PrefetchScalarGridSpec(
            num_scalar_prefetch=0,
            grid=(num_tiles,),
            in_specs=[
                pl.BlockSpec((tile_n, K_pad), lambda i: (i, 0)),
                pl.BlockSpec((K_pad, C_pad), lambda i: (0, 0)),   # resident weights
            ],
            out_specs=(
                pl.BlockSpec((tile_n, C_pad), lambda i: (i, 0)),
                pl.BlockSpec((1, 2, C_pad), lambda i: (i, 0, 0)),
            ),
        ),
        compiler_params=pltpu.CompilerParams(
            dimension_semantics=("parallel",),
        ),
    )(g_p, w_p)


def _norm_act_kernel(y_ref, scale_ref, shift_ref, o_ref, *, leak):
    z = y_ref[...] * scale_ref[...] + shift_ref[...]
    o_ref[...] = jnp.where(z > 0, z, leak * z)


def _norm_add_act_kernel(y_ref, r_ref, scale_ref, shift_ref, o_ref, *, leak):
    z = y_ref[...] * scale_ref[...] + shift_ref[...] + r_ref[...]
    o_ref[...] = jnp.where(z > 0, z, leak * z)


def norm_act(y, scale, shift, *, leak, tile_n, residual=None):
    """Tiled, lane-dense BatchNorm-apply (+ optional residual) + LeakyReLU."""
    N_pad, C_pad = y.shape
    num_tiles = N_pad // tile_n
    row_spec = pl.BlockSpec((tile_n, C_pad), lambda i: (i, 0))
    vec_spec = pl.BlockSpec((1, C_pad), lambda i: (0, 0))
    if residual is None:
        kernel = functools.partial(_norm_act_kernel, leak=leak)
        in_specs = [row_spec, vec_spec, vec_spec]
        args = (y, scale, shift)
    else:
        kernel = functools.partial(_norm_add_act_kernel, leak=leak)
        in_specs = [row_spec, row_spec, vec_spec, vec_spec]
        args = (y, residual, scale, shift)
    return pl.pallas_call(
        kernel,
        out_shape=jax.ShapeDtypeStruct((N_pad, C_pad), jnp.float32),
        grid_spec=pltpu.PrefetchScalarGridSpec(
            num_scalar_prefetch=0,
            grid=(num_tiles,),
            in_specs=in_specs,
            out_specs=pl.BlockSpec((tile_n, C_pad), lambda i: (i, 0)),
        ),
        compiler_params=pltpu.CompilerParams(
            dimension_semantics=("parallel",),
        ),
    )(*args)


# ---------------------------------------------------------------------------
# BatchNorm finalize (tiny per-channel reduction of the per-tile partials)
# ---------------------------------------------------------------------------

def bn_scale_shift(stats, n, gamma_pad, beta_pad, eps):
    """Global batch stats over the true N rows (pad rows are exact zeros, so
    they contribute nothing to sum/sumsq). Matches BatchNorm1d with
    track_running_stats=False: batch mean, biased variance, eps=1e-4."""
    s = jnp.sum(stats, axis=0)                    # (2, C_pad)
    mean = s[0] / n
    var = s[1] / n - mean * mean
    scale = gamma_pad * jax.lax.rsqrt(var + eps)
    shift = beta_pad - mean * scale
    return scale[None, :], shift[None, :]         # (1, C_pad) each


# ---------------------------------------------------------------------------
# Sparse "rulebook" glue (plain JAX): neighbor map + im2col gather
# ---------------------------------------------------------------------------

_OFFSETS = jnp.array(
    [[dx, dy, dz] for dx in (-1, 0, 1) for dy in (-1, 0, 1) for dz in (-1, 0, 1)],
    dtype=jnp.int32,
)  # (27, 3)


def build_neighbor_map(coords):
    """coords: (N, 3) unique int coords -> (27, N) neighbor row index or -1.

    Sort + searchsorted on linearized coordinates: O(27 N log N)."""
    c = coords - coords.min(axis=0) + 1            # coords +/- 1 stay >= 0
    dims = c.max(axis=0) + 2

    def lin(p):
        return (p[..., 0] * dims[1] + p[..., 1]) * dims[2] + p[..., 2]

    keys = lin(c)                                  # (N,), unique
    order = jnp.argsort(keys)
    sorted_keys = keys[order]
    tgt = lin(c[None, :, :] + _OFFSETS[:, None, :])            # (27, N)
    pos = jnp.clip(jnp.searchsorted(sorted_keys, tgt), 0, keys.shape[0] - 1)
    found = sorted_keys[pos] == tgt
    return jnp.where(found, order[pos], -1).astype(jnp.int32)


def gather_im2col(features, nbr_idx):
    """features: (N, C), nbr_idx: (27, N) -> (N, 27*C) im2col matrix.

    Column order is (offset-major, channel-minor), matching
    weight.reshape(27*C, Cout)."""
    # TODO(synk): fuse this gather into the conv kernel (scalar-prefetched
    # rulebook + in-kernel DMA gather) to avoid the 27x im2col HBM round trip.
    safe = jnp.maximum(nbr_idx, 0)
    g = jnp.take(features, safe, axis=0)                       # (27, N, C)
    g = jnp.where((nbr_idx >= 0)[..., None], g, 0.0)
    return jnp.transpose(g, (1, 0, 2)).reshape(features.shape[0], -1)


# ---------------------------------------------------------------------------
# SparseResBlock
# ---------------------------------------------------------------------------

class SparseResBlock:
    """Pallas port of the scn SparseResBlock: submanifold conv (k=3, no bias),
    BatchNorm1d(eps=1e-4, batch stats) + LeakyReLU(0.05) x2, conv, BN,
    residual AddTable, scn.LeakyReLU (leak=0.333)."""

    def __init__(self, num_in, num_out, key):
        kw = jax.random.split(key, 9)
        s1 = 1.0 / jnp.sqrt(27.0 * num_in)
        s2 = 1.0 / jnp.sqrt(27.0 * num_out)
        # scn SubmanifoldConvolution weight: (kernel_volume, nIn, nOut), no
        # bias; stored pre-flattened to (27*nIn, nOut) for the im2col matmul.
        self.w1 = (s1 * jax.random.normal(kw[0], (27, num_in, num_out),
                                          jnp.float32)).reshape(27 * num_in, num_out)
        self.w2 = (s2 * jax.random.normal(kw[1], (27, num_out, num_out),
                                          jnp.float32)).reshape(27 * num_out, num_out)
        self.w3 = (s2 * jax.random.normal(kw[2], (27, num_out, num_out),
                                          jnp.float32)).reshape(27 * num_out, num_out)

        # BatchNorm affine params (distinct keys), zero-padded to the
        # lane-dense channel width (pad channels: gamma=beta=0 -> stay zero).
        self.c_pad = _round_up(num_out, 128)
        pad = (0, self.c_pad - num_out)

        def bn_param(k, base):
            p = base + 0.1 * jax.random.normal(k, (num_out,), jnp.float32)
            return jnp.pad(p, pad)

        self.g1, self.b1 = bn_param(kw[3], 1.0), bn_param(kw[4], 0.0)
        self.g2, self.b2 = bn_param(kw[5], 1.0), bn_param(kw[6], 0.0)
        self.g3, self.b3 = bn_param(kw[7], 1.0), bn_param(kw[8], 0.0)

        self.num_in = num_in
        self.num_out = num_out

    def __call__(self, coords, features):
        N = features.shape[0]
        C = self.num_out
        eps = 1e-4
        nbr = build_neighbor_map(coords)
        tile_n = min(512, _round_up(N, 8))

        def conv_bn(feats, w, gamma, beta, leak, residual=None):
            y, stats = subm_conv(gather_im2col(feats, nbr), w, tile_n=tile_n)
            scale, shift = bn_scale_shift(stats, N, gamma, beta, eps)
            return norm_act(y, scale, shift, leak=leak, tile_n=tile_n,
                            residual=residual)

        # conv_block1: SubmanifoldConvolution + BatchNorm1d + LeakyReLU(0.05)
        x = conv_bn(features, self.w1, self.g1, self.b1, 0.05)
        res = x
        # conv_block2
        x = conv_bn(x[:N, :C], self.w2, self.g2, self.b2, 0.05)
        # conv_block3 + norm + AddTable + scn.LeakyReLU (default leak 0.333)
        x = conv_bn(x[:N, :C], self.w3, self.g3, self.b3, 0.333, residual=res)
        return x[:N, :C]


# ---------------------------------------------------------------------------
# Demo
# ---------------------------------------------------------------------------

if __name__ == "__main__":
    key = jax.random.PRNGKey(0)
    k_coords, k_feat, k_params = jax.random.split(key, 3)

    num_in, num_out = 4, 8
    N_active = 64
    grid = 8  # 8x8x8 spatial domain

    # Unique active voxel coordinates: permutation of the flat grid, take N.
    flat = jax.random.permutation(k_coords, grid * grid * grid)[:N_active]
    coords = jnp.stack(
        [flat // (grid * grid), (flat // grid) % grid, flat % grid], axis=-1
    ).astype(jnp.int32)                                            # (64, 3)
    features = jax.random.normal(k_feat, (N_active, num_in), jnp.float32)

    block = SparseResBlock(num_in, num_out, k_params)
    out = jax.block_until_ready(block(coords, features))

    assert out.shape == (N_active, num_out)
    assert jnp.all(jnp.isfinite(out))
    print("KERNEL_OK")
</pallas_src>

<mosaic_0001>
module attributes {stable_mosaic.version = 11 : i64} {
  func.func @_conv_stats_kernel(%arg0: i32, %arg1: memref<64x128xbf16, #tpu.memory_space<vmem>>, %arg2: memref<128x128xbf16, #tpu.memory_space<vmem>>, %arg3: memref<64x128xf32, #tpu.memory_space<vmem>>, %arg4: memref<1x2x128xf32, #tpu.memory_space<vmem>>) attributes {dimension_semantics = [#tpu.dimension_semantics<parallel>], iteration_bounds = array<i64: 1>, scalar_prefetch = 0 : i64, scratch_operands = 0 : i64, tpu.core_type = #tpu.core_type<tc>, window_params = [{transform_indices = @transform_0, window_bounds = array<i64: 64, 128>}, {pipeline_mode = #tpu.pipeline_mode<synchronous>, transform_indices = @transform_1, window_bounds = array<i64: 128, 128>}, {transform_indices = @transform_2, window_bounds = array<i64: 64, 128>}, {transform_indices = @transform_3, window_bounds = array<i64: 1, 2, 128>}]} {
    %c0 = arith.constant 0 : index
    %c0_0 = arith.constant 0 : index
    %0 = vector.load %arg1[%c0, %c0_0] : memref<64x128xbf16, #tpu.memory_space<vmem>>, vector<64x128xbf16>
    %c0_1 = arith.constant 0 : index
    %c0_2 = arith.constant 0 : index
    %1 = vector.load %arg2[%c0_1, %c0_2] : memref<128x128xbf16, #tpu.memory_space<vmem>>, vector<128x128xbf16>
    %cst = arith.constant dense<0.000000e+00> : vector<64x128xf32>
    %2 = tpu.matmul %0, %1, %cst {dimension_numbers = #tpu.dot_dimension_numbers<[1], [0], [0], [1], [0, 0, 1, 1], [], []>} : vector<64x128xbf16>, vector<128x128xbf16>, vector<64x128xf32> -> vector<64x128xf32>
    %c0_3 = arith.constant 0 : index
    %c0_4 = arith.constant 0 : index
    %3 = vector.load %arg3[%c0_3, %c0_4] : memref<64x128xf32, #tpu.memory_space<vmem>>, vector<64x128xf32>
    tpu.vector_store %arg3[%c0_3, %c0_4], %2 {strides = array<i32>} : memref<64x128xf32, #tpu.memory_space<vmem>>, vector<64x128xf32>,
    %cst_5 = arith.constant dense<0.000000e+00> : vector<128xf32>
    %4 = vector.multi_reduction <add>, %2, %cst_5 [0] : vector<64x128xf32> to vector<128xf32>
    %5 = vector.shape_cast %4 : vector<128xf32> to vector<1x128xf32>
    %6 = arith.mulf %2, %2 : vector<64x128xf32>
    %cst_6 = arith.constant dense<0.000000e+00> : vector<128xf32>
    %7 = vector.multi_reduction <add>, %6, %cst_6 [0] : vector<64x128xf32> to vector<128xf32>
    %8 = vector.shape_cast %7 : vector<128xf32> to vector<1x128xf32>
    %9 = tpu.concatenate %5, %8 in 0 : vector<1x128xf32>, vector<1x128xf32> -> vector<2x128xf32>
    %10 = vector.shape_cast %9 : vector<2x128xf32> to vector<1x2x128xf32>
    %c0_7 = arith.constant 0 : index
    %c0_8 = arith.constant 0 : index
    %c0_9 = arith.constant 0 : index
    %11 = vector.load %arg4[%c0_7, %c0_8, %c0_9] : memref<1x2x128xf32, #tpu.memory_space<vmem>>, vector<1x2x128xf32>
    tpu.vector_store %arg4[%c0_7, %c0_8, %c0_9], %10 {strides = array<i32>} : memref<1x2x128xf32, #tpu.memory_space<vmem>>, vector<1x2x128xf32>,
    return
  }
  func.func @transform_0(%arg0: i32) -> (i32, i32) {
    %c0_i32 = arith.constant 0 : i32
    %c0_i32_0 = arith.constant 0 : i32
    return %arg0, %c0_i32 : i32, i32
  }
  func.func @transform_1(%arg0: i32) -> (i32, i32) {
    %c0_i32 = arith.constant 0 : i32
    %c0_i32_0 = arith.constant 0 : i32
    %c0_i32_1 = arith.constant 0 : i32
    return %c0_i32, %c0_i32_0 : i32, i32
  }
  func.func @transform_2(%arg0: i32) -> (i32, i32) {
    %c0_i32 = arith.constant 0 : i32
    %c0_i32_0 = arith.constant 0 : i32
    return %arg0, %c0_i32 : i32, i32
  }
  func.func @transform_3(%arg0: i32) -> (i32, i32, i32) {
    %c0_i32 = arith.constant 0 : i32
    %c0_i32_0 = arith.constant 0 : i32
    %c0_i32_1 = arith.constant 0 : i32
    return %arg0, %c0_i32, %c0_i32_0 : i32, i32, i32
  }
}

</mosaic_0001>

<llo_original>
// kernel: tpu_custom_call.1
$region0: #{tpu_custom_call.1}
  #allocation0 [shape = 'u32[]', space=smem, size = 0x4, offset = 0x4, fixed_abs, tag = 'smem constant byte address 0x4 - core index']
  #allocation1 [shape = 'u32[144,128]{1,0:T(1,128)}', space=vmem, size = 0x12000, scoped, tag = 'internal scratch']
  %s0 = inlined_call_operand.hbm [shape: bf16[64,128], index: 0, kind: input, shape index: {}]
  %s1 = inlined_call_operand.hbm [shape: bf16[128,128], index: 1, kind: input, shape index: {}]
  %s2 = inlined_call_operand.hbm [shape: f32[64,128], index: 2, kind: output, shape index: {0}]
  %s3 = inlined_call_operand.hbm [shape: f32[1,2,128], index: 3, kind: output, shape index: {1}]
  %4 = xla_tuple %s2, %s3
  %s5 = sld [smem:[#allocation0]]
  $region34: #{tpu_custom_call.1} parent=0
    _
  %s7 = ssub.s32 1, %s5
  %s8 = scalar_select 0, %s7, %s5
  $region1: #{tpu_custom_call.1} parent=0
    #allocation2 [shape = 'u8[16384]{0}', space=vmem, size = 0x4000, scoped, tag = 'input window, operand 0, single buffered']
    #allocation3 [shape = 's32[1]{0}', space=sflag, size = 0x4, scoped, tag = 'scoped memory for tpu_custom_call.1']
    #allocation4 [shape = 's32[1]{0}', space=sflag, size = 0x4, scoped, tag = 'scoped memory for tpu_custom_call.1']
    #allocation5 [shape = 'u8[32768]{0}', space=vmem, size = 0x8000, scoped, tag = 'input window, operand 1, single buffered']
    #allocation6 [shape = 's32[1]{0}', space=sflag, size = 0x4, scoped, tag = 'scoped memory for tpu_custom_call.1']
    #allocation7 [shape = 'u8[32768]{0}', space=vmem, size = 0x8000, scoped, tag = 'output window, operand 0, single buffered']
    #allocation8 [shape = 'u8[1024]{0}', space=vmem, size = 0x400, scoped, tag = 'output window, operand 1, single buffered']
    #allocation9 [shape = 's32[1]{0}', space=sflag, size = 0x4, scoped, tag = 'scoped memory for tpu_custom_call.1']
    %9 = vsyncpa [#allocation3], 0
    %10 = vsyncpa [#allocation6], 0
    %11 = vsyncpa [#allocation4], 0
    %12 = vsyncpa [#allocation9], 0
    // Predicated region
    $region2: #{tpu_custom_call.1} parent=1 // pred_check
      _
    $region3: #{tpu_custom_call.1} parent=1 // pred_check_branch
      %14 = sbr.rel (0) target = $region5
    $region4: #{tpu_custom_call.1} parent=1 // pred_region
      %s16 = ssub.s32 512, 512
      %17 = vsyncadd [#allocation3], %s16
      %s18 = sshll.u32 [#allocation2], 4
      %s19 = int_to_ptr.vmem [resolvable:$true] %s18
      %24 = dma.hbm_to_vmem [thread:$0]  %s0, 512, %s19, [#allocation3], 64, 64, 4
    $region5: #{tpu_custom_call.1} parent=1 // pred_fallthru
      _
    // Predicated region
    $region6: #{tpu_custom_call.1} parent=1 // pred_check
      _
    $region7: #{tpu_custom_call.1} parent=1 // pred_check_branch
      %26 = sbr.rel (0) target = $region9
    $region8: #{tpu_custom_call.1} parent=1 // pred_region
      %s28 = ssub.s32 1024, 1024
      %29 = vsyncadd [#allocation6], %s28
      %s30 = sshll.u32 [#allocation5], 4
      %s31 = int_to_ptr.vmem [resolvable:$true] %s30
      %36 = dma.hbm_to_vmem [thread:$0]  %s1, 1024, %s31, [#allocation6], 64, 64, 4
    $region9: #{tpu_custom_call.1} parent=1 // pred_fallthru
      _
    // Predicated region
    $region10: #{tpu_custom_call.1} parent=1 // pred_check
      _
    $region11: #{tpu_custom_call.1} parent=1 // pred_check_branch
      %38 = sbr.rel (0) target = $region13
    $region12: #{tpu_custom_call.1} parent=1 // pred_region
      %39 = dma.done [#allocation3], 512
    $region13: #{tpu_custom_call.1} parent=1 // pred_fallthru
      _
    // Predicated region
    $region14: #{tpu_custom_call.1} parent=1 // pred_check
      _
    $region15: #{tpu_custom_call.1} parent=1 // pred_check_branch
      %41 = sbr.rel (0) target = $region17
    $region16: #{tpu_custom_call.1} parent=1 // pred_region
      %42 = dma.done [#allocation6], 1024
    $region17: #{tpu_custom_call.1} parent=1 // pred_fallthru
      _
    %v44 = vld [vmem:[#allocation2] sm:$0xf]
    %v45 = vld [vmem:[#allocation2 + $0x4] sm:$0xf]
    %v46 = vld [vmem:[#allocation2 + $0x8] sm:$0xf]
    %v47 = vld [vmem:[#allocation2 + $0xc] sm:$0xf]
    %v48 = vld [vmem:[#allocation2 + $0x10] sm:$0xf]
    %v49 = vld [vmem:[#allocation2 + $0x14] sm:$0xf]
    %v50 = vld [vmem:[#allocation2 + $0x18] sm:$0xf]
    %v51 = vld [vmem:[#allocation2 + $0x1c] sm:$0xf]
    %v52 = vld [vmem:[#allocation5] sm:$0xf]
    %v53 = vld [vmem:[#allocation5 + $0x4] sm:$0xf]
    %v54 = vld [vmem:[#allocation5 + $0x8] sm:$0xf]
    %v55 = vld [vmem:[#allocation5 + $0xc] sm:$0xf]
    %v56 = vld [vmem:[#allocation5 + $0x10] sm:$0xf]
    %v57 = vld [vmem:[#allocation5 + $0x14] sm:$0xf]
    %v58 = vld [vmem:[#allocation5 + $0x18] sm:$0xf]
    %v59 = vld [vmem:[#allocation5 + $0x1c] sm:$0xf]
    %v60 = vld [vmem:[#allocation5 + $0x20] sm:$0xf]
    %v61 = vld [vmem:[#allocation5 + $0x24] sm:$0xf]
    %v62 = vld [vmem:[#allocation5 + $0x28] sm:$0xf]
    %v63 = vld [vmem:[#allocation5 + $0x2c] sm:$0xf]
    %v64 = vld [vmem:[#allocation5 + $0x30] sm:$0xf]
    %v65 = vld [vmem:[#allocation5 + $0x34] sm:$0xf]
    %v66 = vld [vmem:[#allocation5 + $0x38] sm:$0xf]
    %v67 = vld [vmem:[#allocation5 + $0x3c] sm:$0xf]
    %v76 = vunpack.c.l.b16 %v44
    %v77 = vunpack.c.l.b16 %v45
    %v78 = vunpack.c.l.b16 %v46
    %v79 = vunpack.c.l.b16 %v47
    %v80 = vunpack.c.l.b16 %v48
    %v81 = vunpack.c.l.b16 %v49
    %v82 = vunpack.c.l.b16 %v50
    %v83 = vunpack.c.l.b16 %v51
    %v84 = vpack.c.b16 %v77, %v76
    %v85 = vpack.c.b16 %v79, %v78
    %v86 = vpack.c.b16 %v81, %v80
    %v87 = vpack.c.b16 %v83, %v82
    %v108 = vunpack.c.l.b16 %v52
    %v109 = vunpack.c.l.b16 %v53
    %v110 = vunpack.c.l.b16 %v54
    %v111 = vunpack.c.l.b16 %v55
    %v112 = vunpack.c.l.b16 %v56
    %v113 = vunpack.c.l.b16 %v57
    %v114 = vunpack.c.l.b16 %v58
    %v115 = vunpack.c.l.b16 %v59
    %v116 = vunpack.c.l.b16 %v60
    %v117 = vunpack.c.l.b16 %v61
    %v118 = vunpack.c.l.b16 %v62
    %v119 = vunpack.c.l.b16 %v63
    %v120 = vunpack.c.l.b16 %v64
    %v121 = vunpack.c.l.b16 %v65
    %v122 = vunpack.c.l.b16 %v66
    %v123 = vunpack.c.l.b16 %v67
    %v124 = vpack.c.b16 %v109, %v108
    %v125 = vpack.c.b16 %v111, %v110
    %v126 = vpack.c.b16 %v113, %v112
    %v127 = vpack.c.b16 %v115, %v114
    %v128 = vpack.c.b16 %v117, %v116
    %v129 = vpack.c.b16 %v119, %v118
    %v130 = vpack.c.b16 %v121, %v120
    %v131 = vpack.c.b16 %v123, %v122
    %140 = vmatprep.subr.bf16.mxu0 0
    %141 = vmatpush1.bf16.msra.mxu0 %v124
    %142 = vmatprep.subr.bf16.mxu0 0
    %143 = vmatpush1.bf16.msra.mxu0 %v125
    %144 = vmatprep.subr.bf16.mxu0 0
    %145 = vmatpush1.bf16.msra.mxu0 %v126
    %146 = vmatprep.subr.bf16.mxu0 0
    %147 = vmatpush1.bf16.msra.mxu0 %v127
    %148 = vmatprep.subr.bf16.mxu0 0
    %149 = vmatpush1.bf16.msra.mxu0 %v128
    %150 = vmatprep.subr.bf16.mxu0 0
    %151 = vmatpush1.bf16.msra.mxu0 %v129
    %152 = vmatprep.subr.bf16.mxu0 0
    %153 = vmatpush1.bf16.msra.mxu0 %v130
    %154 = vmatprep.subr.bf16.mxu0 0
    %155 = vmatpush1.bf16.msra.mxu0 %v131
    %156 = vmatprep.subr.bf16.mxu0 0
    %157 = vmatpush1.bf16.msra.mxu0 0
    %158 = vmatprep.subr.bf16.mxu0 0
    %159 = vmatpush1.bf16.msra.mxu0 0
    %160 = vmatprep.subr.bf16.mxu0 0
    %161 = vmatpush1.bf16.msra.mxu0 0
    %162 = vmatprep.subr.bf16.mxu0 0
    %163 = vmatpush1.bf16.msra.mxu0 0
    %164 = vmatprep.subr.bf16.mxu0 0
    %165 = vmatpush1.bf16.msra.mxu0 0
    %166 = vmatprep.subr.bf16.mxu0 0
    %167 = vmatpush1.bf16.msra.mxu0 0
    %168 = vmatprep.subr.bf16.mxu0 0
    %169 = vmatpush1.bf16.msra.mxu0 0
    %170 = vmatprep.subr.bf16.mxu0 0
    %171 = vmatpush1.bf16.msra.mxu0 0
    %172 = vmatprep.mubr.bf16.mxu0 0
    %173 = vmatmul.mubr.bf16.gmra.mrb[0].mxu0 %v84
    %v174 = vpop.f32.mrb[0].mxu0
    %v175 = vadd.f32 0.0, %v174
    %v176 = vpop.f32.mrb[0].mxu0
    %v177 = vpop.f32.mrb[0].mxu0
    %v178 = vadd.f32 0.0, %v177
    %v179 = vpop.f32.mrb[0].mxu0
    %180 = vmatprep.mubr.bf16.mxu0 0
    %181 = vmatmul.mubr.bf16.gmra.mrb[0].mxu0 %v85
    %v182 = vpop.f32.mrb[0].mxu0
    %v183 = vadd.f32 0.0, %v182
    %v184 = vpop.f32.mrb[0].mxu0
    %v185 = vpop.f32.mrb[0].mxu0
    %v186 = vadd.f32 0.0, %v185
    %v187 = vpop.f32.mrb[0].mxu0
    %188 = vmatprep.mubr.bf16.mxu0 0
    %189 = vmatmul.mubr.bf16.gmra.mrb[0].mxu0 %v86
    %v190 = vpop.f32.mrb[0].mxu0
    %v191 = vadd.f32 0.0, %v190
    %v192 = vpop.f32.mrb[0].mxu0
    %v193 = vpop.f32.mrb[0].mxu0
    %v194 = vadd.f32 0.0, %v193
    %v195 = vpop.f32.mrb[0].mxu0
    %196 = vmatprep.mubr.bf16.mxu0 0
    %197 = vmatmul.mubr.bf16.gmra.mrb[0].mxu0 %v87
    %v198 = vpop.f32.mrb[0].mxu0
    %v199 = vadd.f32 0.0, %v198
    %v200 = vpop.f32.mrb[0].mxu0
    %v201 = vpop.f32.mrb[0].mxu0
    %v202 = vadd.f32 0.0, %v201
    %v203 = vpop.f32.mrb[0].mxu0
    %204 = vdwg.mxu0
    %205 = vst [vmem:[#allocation7] sm:$0xff] %v175
    %206 = vst [vmem:[#allocation7 + $0x8] sm:$0xff] %v178
    %207 = vst [vmem:[#allocation7 + $0x10] sm:$0xff] %v183
    %208 = vst [vmem:[#allocation7 + $0x18] sm:$0xff] %v186
    %209 = vst [vmem:[#allocation7 + $0x20] sm:$0xff] %v191
    %210 = vst [vmem:[#allocation7 + $0x28] sm:$0xff] %v194
    %211 = vst [vmem:[#allocation7 + $0x30] sm:$0xff] %v199
    %212 = vst [vmem:[#allocation7 + $0x38] sm:$0xff] %v202
    %v213 = vadd.f32 %v175, %v178
    %v214 = vadd.f32 %v213, %v183
    %v215 = vadd.f32 %v214, %v186
    %v216 = vadd.f32 %v215, %v191
    %v217 = vadd.f32 %v216, %v194
    %v218 = vadd.f32 %v217, %v199
    %v219 = vadd.f32 %v218, %v202
    %v220 = vrot.slane %v219, 4
    %v221 = vadd.f32 %v219, %v220
    %v222 = vrot.slane %v221, 2
    %v223 = vadd.f32 %v221, %v222
    %v224 = vrot.slane %v223, 1
    %v225 = vadd.f32 %v223, %v224
    %v226 = vmul.f32 %v175, %v175
    %v227 = vmul.f32 %v178, %v178
    %v228 = vmul.f32 %v183, %v183
    %v229 = vmul.f32 %v186, %v186
    %v230 = vmul.f32 %v191, %v191
    %v231 = vmul.f32 %v194, %v194
    %v232 = vmul.f32 %v199, %v199
    %v233 = vmul.f32 %v202, %v202
    %v234 = vadd.f32 %v226, %v227
    %v235 = vadd.f32 %v234, %v228
    %v236 = vadd.f32 %v235, %v229
    %v237 = vadd.f32 %v236, %v230
    %v238 = vadd.f32 %v237, %v231
    %v239 = vadd.f32 %v238, %v232
    %v240 = vadd.f32 %v239, %v233
    %v241 = vrot.slane %v240, 4
    %v242 = vadd.f32 %v240, %v241
    %v243 = vrot.slane %v242, 2
    %v244 = vadd.f32 %v242, %v243
    %v245 = vrot.slane %v244, 1
    %v246 = vadd.f32 %v244, %v245
    %vm247 = vcmask 1040384
    %v248 = vsel %vm247, %v225, %v246
    %249 = vst [vmem:[#allocation8] sm:$0x3] %v248
    // Predicated region
    $region18: #{tpu_custom_call.1} parent=1 // pred_check
      _
    $region19: #{tpu_custom_call.1} parent=1 // pred_check_branch
      %251 = sbr.rel (0) target = $region21
    $region20: #{tpu_custom_call.1} parent=1 // pred_region
      %s253 = ssub.s32 1024, 1024
      %254 = vsyncadd [#allocation4], %s253
      %s255 = sshll.u32 [#allocation7], 4
      %s256 = int_to_ptr.vmem [resolvable:$true] %s255
      %261 = dma.vmem_to_hbm [thread:$0]  %s256, 1024, %s2, [#allocation4], 128, 128, 8
    $region21: #{tpu_custom_call.1} parent=1 // pred_fallthru
      _
    // Predicated region
    $region22: #{tpu_custom_call.1} parent=1 // pred_check
      _
    $region23: #{tpu_custom_call.1} parent=1 // pred_check_branch
      %263 = sbr.rel (0) target = $region25
    $region24: #{tpu_custom_call.1} parent=1 // pred_region
      %s265 = ssub.s32 32, 32
      %266 = vsyncadd [#allocation9], %s265
      %s268 = sshll.u32 [#allocation8], 4
      %s269 = int_to_ptr.vmem [resolvable:$true] %s268
      %271 = dma.vmem_to_hbm [thread:$0]  %s269, 32, %s3, [#allocation9]
    $region25: #{tpu_custom_call.1} parent=1 // pred_fallthru
      _
    // Predicated region
    $region26: #{tpu_custom_call.1} parent=1 // pred_check
      _
    $region27: #{tpu_custom_call.1} parent=1 // pred_check_branch
      %273 = sbr.rel (0) target = $region29
    $region28: #{tpu_custom_call.1} parent=1 // pred_region
      %274 = dma.done [#allocation4], 1024
    $region29: #{tpu_custom_call.1} parent=1 // pred_fallthru
      _
    // Predicated region
    $region30: #{tpu_custom_call.1} parent=1 // pred_check
      _
    $region31: #{tpu_custom_call.1} parent=1 // pred_check_branch
      %276 = sbr.rel (0) target = $region33
    $region32: #{tpu_custom_call.1} parent=1 // pred_region
      %277 = dma.done [#allocation9], 32
    $region33: #{tpu_custom_call.1} parent=1 // pred_fallthru
      _
    %278 = vsyncpa [#allocation3], 1
    %279 = vsyncpa [#allocation6], 1
    %280 = vsyncpa [#allocation4], 1
    %281 = vsyncpa [#allocation9], 1

</llo_original>
